<compile_context>
chip_gen: v5e
topology: v5e:2x2
jax: 0.10.0
libtpu: 0.0.40
codegen_flags: <defaults>
</compile_context>

<pallas_src>
import jax
import jax.numpy as jnp
from jax.experimental import pallas as pl
from jax.experimental.pallas import tpu as pltpu

LANE = 128     # lane width: padded feature dims are multiples of this
SUBLANE = 8    # sublane granularity for the batch (second-to-last) dim


def _round_up(n, m):
    return ((n + m - 1) // m) * m


def _pad2d(a, rows, cols):
    pr, pc = rows - a.shape[0], cols - a.shape[1]
    if pr == 0 and pc == 0:
        return a
    return jnp.pad(a, ((0, pr), (0, pc)))


def mlp_kernel(x_ref, w1_ref, b1_ref, w2_ref, b2_ref,
               w3_ref, b3_ref, w4_ref, b4_ref, o_ref):
    # fc1 + relu  (bf16 MXU operands, f32 accumulate, f32 bias/ReLU on the VPU)
    x = x_ref[...].astype(jnp.bfloat16)
    h = jnp.dot(x, w1_ref[...], preferred_element_type=jnp.float32)
    h = jnp.maximum(h + b1_ref[...], 0.0)
    # fc2 + relu
    h = jnp.dot(h.astype(jnp.bfloat16), w2_ref[...],
                preferred_element_type=jnp.float32)
    h = jnp.maximum(h + b2_ref[...], 0.0)
    # fc3 + relu
    h = jnp.dot(h.astype(jnp.bfloat16), w3_ref[...],
                preferred_element_type=jnp.float32)
    h = jnp.maximum(h + b3_ref[...], 0.0)
    # fc4 (no activation), lane-dense (128-wide) f32 store
    h = jnp.dot(h.astype(jnp.bfloat16), w4_ref[...],
                preferred_element_type=jnp.float32)
    o_ref[...] = (h + b4_ref[...]).astype(o_ref.dtype)


def simple_nn_forward(x, params, *, tile_b=512):
    """x: [B, input_size] f32. params: dict of (W^T [in,out], b [1,out]) f32 pairs.

    Returns [B, output_size] f32. Hidden/output feature dims are zero-padded to
    128 lanes (input feature dim stays native); matmuls run bf16 on the MXU with
    f32 accumulation.
    """
    w1, b1, w2, b2, w3, b3, w4, b4 = (
        params["w1"], params["b1"], params["w2"], params["b2"],
        params["w3"], params["b3"], params["w4"], params["b4"],
    )
    B, in_size = x.shape
    hid_size = w1.shape[1]
    out_size = w4.shape[1]

    hid_pad = _round_up(hid_size, LANE)
    out_pad = _round_up(out_size, LANE)

    # Batch tile: >=tile_b rows for large batches, collapse (as a multiple of 8
    # sublanes) for small ones; pad batch to a whole number of tiles.
    tb = min(tile_b, _round_up(B, SUBLANE))
    tb = _round_up(tb, SUBLANE)
    b_pad = _round_up(B, tb)

    # x: pad only the batch dim, keep f32 + native feature width (cast in-kernel).
    xp = _pad2d(x, b_pad, in_size)
    # Weights bf16 for the MXU; biases stay f32. Zero padding preserves semantics.
    w1p = _pad2d(w1, in_size, hid_pad).astype(jnp.bfloat16)
    w2p = _pad2d(w2, hid_pad, hid_pad).astype(jnp.bfloat16)
    w3p = _pad2d(w3, hid_pad, hid_pad).astype(jnp.bfloat16)
    w4p = _pad2d(w4, hid_pad, out_pad).astype(jnp.bfloat16)
    b1p = _pad2d(b1, 1, hid_pad)
    b2p = _pad2d(b2, 1, hid_pad)
    b3p = _pad2d(b3, 1, hid_pad)
    b4p = _pad2d(b4, 1, out_pad)

    grid = (b_pad // tb,)

    x_spec = pl.BlockSpec((tb, in_size), lambda i: (i, 0))
    out_spec = pl.BlockSpec((tb, out_pad), lambda i: (i, 0))
    # Weights/biases: same block every grid step -> DMA'd once, VMEM-resident.
    resident = lambda r, c: pl.BlockSpec((r, c), lambda i: (0, 0))

    out = pl.pallas_call(
        mlp_kernel,
        out_shape=jax.ShapeDtypeStruct((b_pad, out_pad), jnp.float32),
        grid=grid,
        in_specs=[x_spec,
                  resident(in_size, hid_pad), resident(1, hid_pad),
                  resident(hid_pad, hid_pad), resident(1, hid_pad),
                  resident(hid_pad, hid_pad), resident(1, hid_pad),
                  resident(hid_pad, out_pad), resident(1, out_pad)],
        out_specs=out_spec,
        compiler_params=pltpu.CompilerParams(
            dimension_semantics=("parallel",)),  # batch tiles are independent
    )(xp, w1p, b1p, w2p, b2p, w3p, b3p, w4p, b4p)

    return out[:B, :out_size]


def init_params(key, input_size, hidden_size, output_size):
    """Deterministic init mirroring nn.Linear shapes (weights stored transposed)."""
    dims = [(input_size, hidden_size),
            (hidden_size, hidden_size),
            (hidden_size, hidden_size),
            (hidden_size, output_size)]
    params = {}
    for i, (fan_in, fan_out) in enumerate(dims, start=1):
        key, kw, kb = jax.random.split(key, 3)
        bound = 1.0 / (fan_in ** 0.5)  # PyTorch default uniform bound
        # stored as [in, out] == W.T of nn.Linear's [out, in]
        params[f"w{i}"] = jax.random.uniform(
            kw, (fan_in, fan_out), jnp.float32, -bound, bound)
        params[f"b{i}"] = jax.random.uniform(
            kb, (1, fan_out), jnp.float32, -bound, bound)
    return params


if __name__ == "__main__":
    input_size, hidden_size, output_size = 32, 64, 16
    batch = 8

    key = jax.random.PRNGKey(0)
    key, kx = jax.random.split(key)
    x = jax.random.normal(kx, (batch, input_size), dtype=jnp.float32)
    params = init_params(key, input_size, hidden_size, output_size)

    out = simple_nn_forward(x, params)
    jax.block_until_ready(out)

    # Reference check in plain JAX (f32). Tolerance relaxed because the kernel
    # feeds the MXU bf16 operands (f32 accumulate).
    h = x
    for i in range(1, 5):
        h = h @ params[f"w{i}"] + params[f"b{i}"]
        if i < 4:
            h = jnp.maximum(h, 0.0)
    assert out.shape == (batch, output_size)
    assert jnp.allclose(out, h, atol=3e-2, rtol=3e-2), "mismatch vs reference"
    print("KERNEL_OK")
</pallas_src>

<mosaic_0001>
module attributes {stable_mosaic.version = 11 : i64} {
  func.func @mlp_kernel(%arg0: i32, %arg1: memref<8x32xf32, #tpu.memory_space<vmem>>, %arg2: memref<32x128xbf16, #tpu.memory_space<vmem>>, %arg3: memref<1x128xf32, #tpu.memory_space<vmem>>, %arg4: memref<128x128xbf16, #tpu.memory_space<vmem>>, %arg5: memref<1x128xf32, #tpu.memory_space<vmem>>, %arg6: memref<128x128xbf16, #tpu.memory_space<vmem>>, %arg7: memref<1x128xf32, #tpu.memory_space<vmem>>, %arg8: memref<128x128xbf16, #tpu.memory_space<vmem>>, %arg9: memref<1x128xf32, #tpu.memory_space<vmem>>, %arg10: memref<8x128xf32, #tpu.memory_space<vmem>>) attributes {dimension_semantics = [#tpu.dimension_semantics<parallel>], iteration_bounds = array<i64: 1>, scalar_prefetch = 0 : i64, scratch_operands = 0 : i64, tpu.core_type = #tpu.core_type<tc>, window_params = [{transform_indices = @transform_0, window_bounds = array<i64: 8, 32>}, {pipeline_mode = #tpu.pipeline_mode<synchronous>, transform_indices = @transform_1, window_bounds = array<i64: 32, 128>}, {pipeline_mode = #tpu.pipeline_mode<synchronous>, transform_indices = @transform_2, window_bounds = array<i64: 1, 128>}, {pipeline_mode = #tpu.pipeline_mode<synchronous>, transform_indices = @transform_3, window_bounds = array<i64: 128, 128>}, {pipeline_mode = #tpu.pipeline_mode<synchronous>, transform_indices = @transform_4, window_bounds = array<i64: 1, 128>}, {pipeline_mode = #tpu.pipeline_mode<synchronous>, transform_indices = @transform_5, window_bounds = array<i64: 128, 128>}, {pipeline_mode = #tpu.pipeline_mode<synchronous>, transform_indices = @transform_6, window_bounds = array<i64: 1, 128>}, {pipeline_mode = #tpu.pipeline_mode<synchronous>, transform_indices = @transform_7, window_bounds = array<i64: 128, 128>}, {pipeline_mode = #tpu.pipeline_mode<synchronous>, transform_indices = @transform_8, window_bounds = array<i64: 1, 128>}, {transform_indices = @transform_9, window_bounds = array<i64: 8, 128>}]} {
    %c0 = arith.constant 0 : index
    %c0_0 = arith.constant 0 : index
    %0 = vector.load %arg1[%c0, %c0_0] : memref<8x32xf32, #tpu.memory_space<vmem>>, vector<8x32xf32>
    %1 = arith.truncf %0 : vector<8x32xf32> to vector<8x32xbf16>
    %c0_1 = arith.constant 0 : index
    %c0_2 = arith.constant 0 : index
    %2 = vector.load %arg2[%c0_1, %c0_2] : memref<32x128xbf16, #tpu.memory_space<vmem>>, vector<32x128xbf16>
    %cst = arith.constant dense<0.000000e+00> : vector<8x128xf32>
    %3 = tpu.matmul %1, %2, %cst {dimension_numbers = #tpu.dot_dimension_numbers<[1], [0], [0], [1], [0, 0, 1, 1], [], []>} : vector<8x32xbf16>, vector<32x128xbf16>, vector<8x128xf32> -> vector<8x128xf32>
    %c0_3 = arith.constant 0 : index
    %c0_4 = arith.constant 0 : index
    %4 = vector.load %arg3[%c0_3, %c0_4] : memref<1x128xf32, #tpu.memory_space<vmem>>, vector<1x128xf32>
    %5 = vector.broadcast %4 : vector<1x128xf32> to vector<8x128xf32>
    %6 = arith.addf %3, %5 : vector<8x128xf32>
    %cst_5 = arith.constant 0.000000e+00 : f32
    %7 = vector.broadcast %cst_5 : f32 to vector<8x128xf32>
    %8 = arith.maximumf %6, %7 : vector<8x128xf32>
    %9 = arith.truncf %8 : vector<8x128xf32> to vector<8x128xbf16>
    %c0_6 = arith.constant 0 : index
    %c0_7 = arith.constant 0 : index
    %10 = vector.load %arg4[%c0_6, %c0_7] : memref<128x128xbf16, #tpu.memory_space<vmem>>, vector<128x128xbf16>
    %cst_8 = arith.constant dense<0.000000e+00> : vector<8x128xf32>
    %11 = tpu.matmul %9, %10, %cst_8 {dimension_numbers = #tpu.dot_dimension_numbers<[1], [0], [0], [1], [0, 0, 1, 1], [], []>} : vector<8x128xbf16>, vector<128x128xbf16>, vector<8x128xf32> -> vector<8x128xf32>
    %c0_9 = arith.constant 0 : index
    %c0_10 = arith.constant 0 : index
    %12 = vector.load %arg5[%c0_9, %c0_10] : memref<1x128xf32, #tpu.memory_space<vmem>>, vector<1x128xf32>
    %13 = vector.broadcast %12 : vector<1x128xf32> to vector<8x128xf32>
    %14 = arith.addf %11, %13 : vector<8x128xf32>
    %cst_11 = arith.constant 0.000000e+00 : f32
    %15 = vector.broadcast %cst_11 : f32 to vector<8x128xf32>
    %16 = arith.maximumf %14, %15 : vector<8x128xf32>
    %17 = arith.truncf %16 : vector<8x128xf32> to vector<8x128xbf16>
    %c0_12 = arith.constant 0 : index
    %c0_13 = arith.constant 0 : index
    %18 = vector.load %arg6[%c0_12, %c0_13] : memref<128x128xbf16, #tpu.memory_space<vmem>>, vector<128x128xbf16>
    %cst_14 = arith.constant dense<0.000000e+00> : vector<8x128xf32>
    %19 = tpu.matmul %17, %18, %cst_14 {dimension_numbers = #tpu.dot_dimension_numbers<[1], [0], [0], [1], [0, 0, 1, 1], [], []>} : vector<8x128xbf16>, vector<128x128xbf16>, vector<8x128xf32> -> vector<8x128xf32>
    %c0_15 = arith.constant 0 : index
    %c0_16 = arith.constant 0 : index
    %20 = vector.load %arg7[%c0_15, %c0_16] : memref<1x128xf32, #tpu.memory_space<vmem>>, vector<1x128xf32>
    %21 = vector.broadcast %20 : vector<1x128xf32> to vector<8x128xf32>
    %22 = arith.addf %19, %21 : vector<8x128xf32>
    %cst_17 = arith.constant 0.000000e+00 : f32
    %23 = vector.broadcast %cst_17 : f32 to vector<8x128xf32>
    %24 = arith.maximumf %22, %23 : vector<8x128xf32>
    %25 = arith.truncf %24 : vector<8x128xf32> to vector<8x128xbf16>
    %c0_18 = arith.constant 0 : index
    %c0_19 = arith.constant 0 : index
    %26 = vector.load %arg8[%c0_18, %c0_19] : memref<128x128xbf16, #tpu.memory_space<vmem>>, vector<128x128xbf16>
    %cst_20 = arith.constant dense<0.000000e+00> : vector<8x128xf32>
    %27 = tpu.matmul %25, %26, %cst_20 {dimension_numbers = #tpu.dot_dimension_numbers<[1], [0], [0], [1], [0, 0, 1, 1], [], []>} : vector<8x128xbf16>, vector<128x128xbf16>, vector<8x128xf32> -> vector<8x128xf32>
    %c0_21 = arith.constant 0 : index
    %c0_22 = arith.constant 0 : index
    %28 = vector.load %arg9[%c0_21, %c0_22] : memref<1x128xf32, #tpu.memory_space<vmem>>, vector<1x128xf32>
    %29 = vector.broadcast %28 : vector<1x128xf32> to vector<8x128xf32>
    %30 = arith.addf %27, %29 : vector<8x128xf32>
    %c0_23 = arith.constant 0 : index
    %c0_24 = arith.constant 0 : index
    %31 = vector.load %arg10[%c0_23, %c0_24] : memref<8x128xf32, #tpu.memory_space<vmem>>, vector<8x128xf32>
    tpu.vector_store %arg10[%c0_23, %c0_24], %30 {strides = array<i32>} : memref<8x128xf32, #tpu.memory_space<vmem>>, vector<8x128xf32>,
    return
  }
  func.func @transform_0(%arg0: i32) -> (i32, i32) {
    %c0_i32 = arith.constant 0 : i32
    %c0_i32_0 = arith.constant 0 : i32
    return %arg0, %c0_i32 : i32, i32
  }
  func.func @transform_1(%arg0: i32) -> (i32, i32) {
    %c0_i32 = arith.constant 0 : i32
    %c0_i32_0 = arith.constant 0 : i32
    %c0_i32_1 = arith.constant 0 : i32
    return %c0_i32, %c0_i32_0 : i32, i32
  }
  func.func @transform_2(%arg0: i32) -> (i32, i32) {
    %c0_i32 = arith.constant 0 : i32
    %c0_i32_0 = arith.constant 0 : i32
    %c0_i32_1 = arith.constant 0 : i32
    return %c0_i32, %c0_i32_0 : i32, i32
  }
  func.func @transform_3(%arg0: i32) -> (i32, i32) {
    %c0_i32 = arith.constant 0 : i32
    %c0_i32_0 = arith.constant 0 : i32
    %c0_i32_1 = arith.constant 0 : i32
    return %c0_i32, %c0_i32_0 : i32, i32
  }
  func.func @transform_4(%arg0: i32) -> (i32, i32) {
    %c0_i32 = arith.constant 0 : i32
    %c0_i32_0 = arith.constant 0 : i32
    %c0_i32_1 = arith.constant 0 : i32
    return %c0_i32, %c0_i32_0 : i32, i32
  }
  func.func @transform_5(%arg0: i32) -> (i32, i32) {
    %c0_i32 = arith.constant 0 : i32
    %c0_i32_0 = arith.constant 0 : i32
    %c0_i32_1 = arith.constant 0 : i32
    return %c0_i32, %c0_i32_0 : i32, i32
  }
  func.func @transform_6(%arg0: i32) -> (i32, i32) {
    %c0_i32 = arith.constant 0 : i32
    %c0_i32_0 = arith.constant 0 : i32
    %c0_i32_1 = arith.constant 0 : i32
    return %c0_i32, %c0_i32_0 : i32, i32
  }
  func.func @transform_7(%arg0: i32) -> (i32, i32) {
    %c0_i32 = arith.constant 0 : i32
    %c0_i32_0 = arith.constant 0 : i32
    %c0_i32_1 = arith.constant 0 : i32
    return %c0_i32, %c0_i32_0 : i32, i32
  }
  func.func @transform_8(%arg0: i32) -> (i32, i32) {
    %c0_i32 = arith.constant 0 : i32
    %c0_i32_0 = arith.constant 0 : i32
    %c0_i32_1 = arith.constant 0 : i32
    return %c0_i32, %c0_i32_0 : i32, i32
  }
  func.func @transform_9(%arg0: i32) -> (i32, i32) {
    %c0_i32 = arith.constant 0 : i32
    %c0_i32_0 = arith.constant 0 : i32
    return %arg0, %c0_i32 : i32, i32
  }
}

</mosaic_0001>

<llo_original>
// kernel: tpu_custom_call.1
$region0: #{tpu_custom_call.1}
  #allocation0 [shape = 'u32[]', space=smem, size = 0x4, offset = 0x4, fixed_abs, tag = 'smem constant byte address 0x4 - core index']
  #allocation1 [shape = 'u32[72,128]{1,0:T(1,128)}', space=vmem, size = 0x9000, scoped, tag = 'internal scratch']
  %s0 = inlined_call_operand.hbm [shape: f32[8,32], index: 0, kind: input, shape index: {}]
  %s1 = inlined_call_operand.hbm [shape: bf16[32,128], index: 1, kind: input, shape index: {}]
  %s2 = inlined_call_operand.vmem [shape: f32[1,128], index: 2, kind: input, shape index: {}]
  %s3 = inlined_call_operand.hbm [shape: bf16[128,128], index: 3, kind: input, shape index: {}]
  %s4 = inlined_call_operand.vmem [shape: f32[1,128], index: 4, kind: input, shape index: {}]
  %s5 = inlined_call_operand.hbm [shape: bf16[128,128], index: 5, kind: input, shape index: {}]
  %s6 = inlined_call_operand.vmem [shape: f32[1,128], index: 6, kind: input, shape index: {}]
  %s7 = inlined_call_operand.hbm [shape: bf16[128,128], index: 7, kind: input, shape index: {}]
  %s8 = inlined_call_operand.vmem [shape: f32[1,128], index: 8, kind: input, shape index: {}]
  %s9 = inlined_call_operand.hbm [shape: f32[8,128], index: 9, kind: output, shape index: {}]
  %s10 = sld [smem:[#allocation0]]
  $region66: #{tpu_custom_call.1} parent=0
    _
  %s12 = ssub.s32 1, %s10
  %s13 = scalar_select 0, %s12, %s10
  $region1: #{tpu_custom_call.1} parent=0
    #allocation2 [shape = 'u8[4096]{0}', space=vmem, size = 0x1000, scoped, tag = 'input window, operand 0, single buffered']
    #allocation3 [shape = 's32[1]{0}', space=sflag, size = 0x4, scoped, tag = 'scoped memory for tpu_custom_call.1']
    #allocation4 [shape = 's32[1]{0}', space=sflag, size = 0x4, scoped, tag = 'scoped memory for tpu_custom_call.1']
    #allocation5 [shape = 'u8[8192]{0}', space=vmem, size = 0x2000, scoped, tag = 'input window, operand 1, single buffered']
    #allocation6 [shape = 's32[1]{0}', space=sflag, size = 0x4, scoped, tag = 'scoped memory for tpu_custom_call.1']
    #allocation7 [shape = 'u8[32768]{0}', space=vmem, size = 0x8000, scoped, tag = 'input window, operand 3, single buffered']
    #allocation8 [shape = 'u8[32768]{0}', space=vmem, size = 0x8000, scoped, tag = 'input window, operand 5, single buffered']
    #allocation9 [shape = 's32[1]{0}', space=sflag, size = 0x4, scoped, tag = 'scoped memory for tpu_custom_call.1']
    #allocation10 [shape = 'u8[32768]{0}', space=vmem, size = 0x8000, scoped, tag = 'input window, operand 7, single buffered']
    #allocation11 [shape = 'u8[4096]{0}', space=vmem, size = 0x1000, scoped, tag = 'output window, operand 0, single buffered']
    %14 = vsyncpa [#allocation3], 0
    %15 = vsyncpa [#allocation6], 0
    %16 = vsyncpa [#allocation9], 0
    %17 = vsyncpa [#allocation4], 0
    // Predicated region
    $region2: #{tpu_custom_call.1} parent=1 // pred_check
      _
    $region3: #{tpu_custom_call.1} parent=1 // pred_check_branch
      %19 = sbr.rel (0) target = $region5
    $region4: #{tpu_custom_call.1} parent=1 // pred_region
      %21 = vsyncadd [#allocation3], 0
      %s23 = sshll.u32 %s0, 4
      %s24 = int_to_ptr.hbm [resolvable:$true] %s23
      %s25 = sshll.u32 [#allocation2], 4
      %s26 = int_to_ptr.vmem [resolvable:$true] %s25
      %28 = dma.hbm_to_vmem [thread:$0]  %s24, 128, %s26, [#allocation3]
    $region5: #{tpu_custom_call.1} parent=1 // pred_fallthru
      _
    // Predicated region
    $region6: #{tpu_custom_call.1} parent=1 // pred_check
      _
    $region7: #{tpu_custom_call.1} parent=1 // pred_check_branch
      %30 = sbr.rel (0) target = $region9
    $region8: #{tpu_custom_call.1} parent=1 // pred_region
      %32 = vsyncadd [#allocation6], 0
      %s33 = sshll.u32 %s1, 4
      %s34 = int_to_ptr.hbm [resolvable:$true] %s33
      %s35 = sshll.u32 [#allocation5], 4
      %s36 = int_to_ptr.vmem [resolvable:$true] %s35
      %41 = dma.hbm_to_vmem [thread:$0]  %s34, 256, %s36, [#allocation6], 64, 64, 4
    $region9: #{tpu_custom_call.1} parent=1 // pred_fallthru
      _
    // Predicated region
    $region10: #{tpu_custom_call.1} parent=1 // pred_check
      _
    $region11: #{tpu_custom_call.1} parent=1 // pred_check_branch
      %43 = sbr.rel (0) target = $region13
    $region12: #{tpu_custom_call.1} parent=1 // pred_region
      _
    $region13: #{tpu_custom_call.1} parent=1 // pred_fallthru
      _
    // Predicated region
    $region14: #{tpu_custom_call.1} parent=1 // pred_check
      _
    $region15: #{tpu_custom_call.1} parent=1 // pred_check_branch
      %45 = sbr.rel (0) target = $region17
    $region16: #{tpu_custom_call.1} parent=1 // pred_region
      %47 = vsyncadd [#allocation6], 0
      %s48 = sshll.u32 %s3, 4
      %s49 = int_to_ptr.hbm [resolvable:$true] %s48
      %s50 = sshll.u32 [#allocation7], 4
      %s51 = int_to_ptr.vmem [resolvable:$true] %s50
      %56 = dma.hbm_to_vmem [thread:$0]  %s49, 1024, %s51, [#allocation6], 64, 64, 4
    $region17: #{tpu_custom_call.1} parent=1 // pred_fallthru
      _
    // Predicated region
    $region18: #{tpu_custom_call.1} parent=1 // pred_check
      _
    $region19: #{tpu_custom_call.1} parent=1 // pred_check_branch
      %58 = sbr.rel (0) target = $region21
    $region20: #{tpu_custom_call.1} parent=1 // pred_region
      _
    $region21: #{tpu_custom_call.1} parent=1 // pred_fallthru
      _
    // Predicated region
    $region22: #{tpu_custom_call.1} parent=1 // pred_check
      _
    $region23: #{tpu_custom_call.1} parent=1 // pred_check_branch
      %60 = sbr.rel (0) target = $region25
    $region24: #{tpu_custom_call.1} parent=1 // pred_region
      %62 = vsyncadd [#allocation9], 0
      %s63 = sshll.u32 %s5, 4
      %s64 = int_to_ptr.hbm [resolvable:$true] %s63
      %s65 = sshll.u32 [#allocation8], 4
      %s66 = int_to_ptr.vmem [resolvable:$true] %s65
      %71 = dma.hbm_to_vmem [thread:$0]  %s64, 1024, %s66, [#allocation9], 64, 64, 4
    $region25: #{tpu_custom_call.1} parent=1 // pred_fallthru
      _
    // Predicated region
    $region26: #{tpu_custom_call.1} parent=1 // pred_check
      _
    $region27: #{tpu_custom_call.1} parent=1 // pred_check_branch
      %73 = sbr.rel (0) target = $region29
    $region28: #{tpu_custom_call.1} parent=1 // pred_region
      _
    $region29: #{tpu_custom_call.1} parent=1 // pred_fallthru
      _
    // Predicated region
    $region30: #{tpu_custom_call.1} parent=1 // pred_check
      _
    $region31: #{tpu_custom_call.1} parent=1 // pred_check_branch
      %75 = sbr.rel (0) target = $region33
    $region32: #{tpu_custom_call.1} parent=1 // pred_region
      %77 = vsyncadd [#allocation9], 0
      %s78 = sshll.u32 %s7, 4
      %s79 = int_to_ptr.hbm [resolvable:$true] %s78
      %s80 = sshll.u32 [#allocation10], 4
      %s81 = int_to_ptr.vmem [resolvable:$true] %s80
      %86 = dma.hbm_to_vmem [thread:$0]  %s79, 1024, %s81, [#allocation9], 64, 64, 4
    $region33: #{tpu_custom_call.1} parent=1 // pred_fallthru
      _
    // Predicated region
    $region34: #{tpu_custom_call.1} parent=1 // pred_check
      _
    $region35: #{tpu_custom_call.1} parent=1 // pred_check_branch
      %88 = sbr.rel (0) target = $region37
    $region36: #{tpu_custom_call.1} parent=1 // pred_region
      _
    $region37: #{tpu_custom_call.1} parent=1 // pred_fallthru
      _
    // Predicated region
    $region38: #{tpu_custom_call.1} parent=1 // pred_check
      _
    $region39: #{tpu_custom_call.1} parent=1 // pred_check_branch
      %90 = sbr.rel (0) target = $region41
    $region40: #{tpu_custom_call.1} parent=1 // pred_region
      %92 = dma.done [#allocation3], 128
    $region41: #{tpu_custom_call.1} parent=1 // pred_fallthru
      _
    // Predicated region
    $region42: #{tpu_custom_call.1} parent=1 // pred_check
      _
    $region43: #{tpu_custom_call.1} parent=1 // pred_check_branch
      %94 = sbr.rel (0) target = $region45
    $region44: #{tpu_custom_call.1} parent=1 // pred_region
      %96 = dma.done [#allocation6], 256
    $region45: #{tpu_custom_call.1} parent=1 // pred_fallthru
      _
    // Predicated region
    $region46: #{tpu_custom_call.1} parent=1 // pred_check
      _
    $region47: #{tpu_custom_call.1} parent=1 // pred_check_branch
      %98 = sbr.rel (0) target = $region49
    $region48: #{tpu_custom_call.1} parent=1 // pred_region
      %100 = dma.done [#allocation6], 1024
    $region49: #{tpu_custom_call.1} parent=1 // pred_fallthru
      _
    // Predicated region
    $region50: #{tpu_custom_call.1} parent=1 // pred_check
      _
    $region51: #{tpu_custom_call.1} parent=1 // pred_check_branch
      %102 = sbr.rel (0) target = $region53
    $region52: #{tpu_custom_call.1} parent=1 // pred_region
      %104 = dma.done [#allocation9], 1024
    $region53: #{tpu_custom_call.1} parent=1 // pred_fallthru
      _
    // Predicated region
    $region54: #{tpu_custom_call.1} parent=1 // pred_check
      _
    $region55: #{tpu_custom_call.1} parent=1 // pred_check_branch
      %106 = sbr.rel (0) target = $region57
    $region56: #{tpu_custom_call.1} parent=1 // pred_region
      %108 = dma.done [#allocation9], 1024
    $region57: #{tpu_custom_call.1} parent=1 // pred_fallthru
      _
    %v110 = vld [vmem:[#allocation2] sm:$0xff]
    %v111 = vpack.c.bf16 %v110, %v110
    %v112 = vld [vmem:[#allocation5] sm:$0xf]
    %v113 = vld [vmem:[#allocation5 + $0x4] sm:$0xf]
    %v114 = vld [vmem:[#allocation5 + $0x8] sm:$0xf]
    %v115 = vld [vmem:[#allocation5 + $0xc] sm:$0xf]
    %v116 = vld [vmem:[%s2] sm:$0x1]
    %v118 = vperm.slane %v116, 0
    %v124 = vunpack.c.l.b16 %v112
    %v125 = vunpack.c.l.b16 %v113
    %v126 = vunpack.c.l.b16 %v114
    %v127 = vunpack.c.l.b16 %v115
    %v128 = vpack.c.b16 %v125, %v124
    %v129 = vpack.c.b16 %v127, %v126
    %vm132 = vcmask 261120
    %v134 = vsel %vm132, %v111, 0
    %136 = vmatpush.bf16.msra.mxu0 0
    %137 = vmatpush.bf16.msra.mxu0 0
    %138 = vmatpush.bf16.msra.mxu0 0
    %139 = vmatpush.bf16.msra.mxu0 0
    %140 = vmatpush.bf16.msra.mxu0 0
    %141 = vmatpush.bf16.msra.mxu0 0
    %142 = vmatpush.bf16.msra.mxu0 %v129
    %143 = vmatpush.bf16.msra.mxu0 %v128
    %144 = vmatmul.bf16.gmra.mxu0 %v134
    %v145 = vpop.f32.mrf.mxu0
    %v146 = vadd.f32 %v118, %v145
    %v147 = vpop.f32.mrf.mxu0
    %148 = vdwg.mxu0
    %v149 = vmax.f32 %v146, 0.0
    %v150 = vpack.c.bf16 %v149, %v149
    %v151 = vld [vmem:[#allocation7] sm:$0xf]
    %v152 = vld [vmem:[#allocation7 + $0x4] sm:$0xf]
    %v153 = vld [vmem:[#allocation7 + $0x8] sm:$0xf]
    %v154 = vld [vmem:[#allocation7 + $0xc] sm:$0xf]
    %v155 = vld [vmem:[#allocation7 + $0x10] sm:$0xf]
    %v156 = vld [vmem:[#allocation7 + $0x14] sm:$0xf]
    %v157 = vld [vmem:[#allocation7 + $0x18] sm:$0xf]
    %v158 = vld [vmem:[#allocation7 + $0x1c] sm:$0xf]
    %v159 = vld [vmem:[#allocation7 + $0x20] sm:$0xf]
    %v160 = vld [vmem:[#allocation7 + $0x24] sm:$0xf]
    %v161 = vld [vmem:[#allocation7 + $0x28] sm:$0xf]
    %v162 = vld [vmem:[#allocation7 + $0x2c] sm:$0xf]
    %v163 = vld [vmem:[#allocation7 + $0x30] sm:$0xf]
    %v164 = vld [vmem:[#allocation7 + $0x34] sm:$0xf]
    %v165 = vld [vmem:[#allocation7 + $0x38] sm:$0xf]
    %v166 = vld [vmem:[#allocation7 + $0x3c] sm:$0xf]
    %v167 = vld [vmem:[%s4] sm:$0x1]
    %v169 = vperm.slane %v167, 0
    %v187 = vunpack.c.l.b16 %v151
    %v188 = vunpack.c.l.b16 %v152
    %v189 = vunpack.c.l.b16 %v153
    %v190 = vunpack.c.l.b16 %v154
    %v191 = vunpack.c.l.b16 %v155
    %v192 = vunpack.c.l.b16 %v156
    %v193 = vunpack.c.l.b16 %v157
    %v194 = vunpack.c.l.b16 %v158
    %v195 = vunpack.c.l.b16 %v159
    %v196 = vunpack.c.l.b16 %v160
    %v197 = vunpack.c.l.b16 %v161
    %v198 = vunpack.c.l.b16 %v162
    %v199 = vunpack.c.l.b16 %v163
    %v200 = vunpack.c.l.b16 %v164
    %v201 = vunpack.c.l.b16 %v165
    %v202 = vunpack.c.l.b16 %v166
    %v203 = vpack.c.b16 %v188, %v187
    %v204 = vpack.c.b16 %v190, %v189
    %v205 = vpack.c.b16 %v192, %v191
    %v206 = vpack.c.b16 %v194, %v193
    %v207 = vpack.c.b16 %v196, %v195
    %v208 = vpack.c.b16 %v198, %v197
    %v209 = vpack.c.b16 %v200, %v199
    %v210 = vpack.c.b16 %v202, %v201
    %219 = vmatpush.bf16.msra.mxu0 %v210
    %220 = vmatpush.bf16.msra.mxu0 %v209
    %221 = vmatpush.bf16.msra.mxu0 %v208
    %222 = vmatpush.bf16.msra.mxu0 %v207
    %223 = vmatpush.bf16.msra.mxu0 %v206
    %224 = vmatpush.bf16.msra.mxu0 %v205
    %225 = vmatpush.bf16.msra.mxu0 %v204
    %226 = vmatpush.bf16.msra.mxu0 %v203
    %227 = vmatmul.bf16.gmra.mxu0 %v150
    %v228 = vpop.f32.mrf.mxu0
    %v229 = vadd.f32 %v169, %v228
    %v230 = vpop.f32.mrf.mxu0
    %231 = vdwg.mxu0
    %v232 = vmax.f32 %v229, 0.0
    %v233 = vpack.c.bf16 %v232, %v232
    %v234 = vld [vmem:[#allocation8] sm:$0xf]
    %v235 = vld [vmem:[#allocation8 + $0x4] sm:$0xf]
    %v236 = vld [vmem:[#allocation8 + $0x8] sm:$0xf]
    %v237 = vld [vmem:[#allocation8 + $0xc] sm:$0xf]
    %v238 = vld [vmem:[#allocation8 + $0x10] sm:$0xf]
    %v239 = vld [vmem:[#allocation8 + $0x14] sm:$0xf]
    %v240 = vld [vmem:[#allocation8 + $0x18] sm:$0xf]
    %v241 = vld [vmem:[#allocation8 + $0x1c] sm:$0xf]
    %v242 = vld [vmem:[#allocation8 + $0x20] sm:$0xf]
    %v243 = vld [vmem:[#allocation8 + $0x24] sm:$0xf]
    %v244 = vld [vmem:[#allocation8 + $0x28] sm:$0xf]
    %v245 = vld [vmem:[#allocation8 + $0x2c] sm:$0xf]
    %v246 = vld [vmem:[#allocation8 + $0x30] sm:$0xf]
    %v247 = vld [vmem:[#allocation8 + $0x34] sm:$0xf]
    %v248 = vld [vmem:[#allocation8 + $0x38] sm:$0xf]
    %v249 = vld [vmem:[#allocation8 + $0x3c] sm:$0xf]
    %v250 = vld [vmem:[%s6] sm:$0x1]
    %v252 = vperm.slane %v250, 0
    %v270 = vunpack.c.l.b16 %v234
    %v271 = vunpack.c.l.b16 %v235
    %v272 = vunpack.c.l.b16 %v236
    %v273 = vunpack.c.l.b16 %v237
    %v274 = vunpack.c.l.b16 %v238
    %v275 = vunpack.c.l.b16 %v239
    %v276 = vunpack.c.l.b16 %v240
    %v277 = vunpack.c.l.b16 %v241
    %v278 = vunpack.c.l.b16 %v242
    %v279 = vunpack.c.l.b16 %v243
    %v280 = vunpack.c.l.b16 %v244
    %v281 = vunpack.c.l.b16 %v245
    %v282 = vunpack.c.l.b16 %v246
    %v283 = vunpack.c.l.b16 %v247
    %v284 = vunpack.c.l.b16 %v248
    %v285 = vunpack.c.l.b16 %v249
    %v286 = vpack.c.b16 %v271, %v270
    %v287 = vpack.c.b16 %v273, %v272
    %v288 = vpack.c.b16 %v275, %v274
    %v289 = vpack.c.b16 %v277, %v276
    %v290 = vpack.c.b16 %v279, %v278
    %v291 = vpack.c.b16 %v281, %v280
    %v292 = vpack.c.b16 %v283, %v282
    %v293 = vpack.c.b16 %v285, %v284
    %302 = vmatpush.bf16.msra.mxu0 %v293
    %303 = vmatpush.bf16.msra.mxu0 %v292
    %304 = vmatpush.bf16.msra.mxu0 %v291
    %305 = vmatpush.bf16.msra.mxu0 %v290
    %306 = vmatpush.bf16.msra.mxu0 %v289
    %307 = vmatpush.bf16.msra.mxu0 %v288
    %308 = vmatpush.bf16.msra.mxu0 %v287
    %309 = vmatpush.bf16.msra.mxu0 %v286
    %310 = vmatmul.bf16.gmra.mxu0 %v233
    %v311 = vpop.f32.mrf.mxu0
    %v312 = vadd.f32 %v252, %v311
    %v313 = vpop.f32.mrf.mxu0
    %314 = vdwg.mxu0
    %v315 = vmax.f32 %v312, 0.0
    %v316 = vpack.c.bf16 %v315, %v315
    %v317 = vld [vmem:[#allocation10] sm:$0xf]
    %v318 = vld [vmem:[#allocation10 + $0x4] sm:$0xf]
    %v319 = vld [vmem:[#allocation10 + $0x8] sm:$0xf]
    %v320 = vld [vmem:[#allocation10 + $0xc] sm:$0xf]
    %v321 = vld [vmem:[#allocation10 + $0x10] sm:$0xf]
    %v322 = vld [vmem:[#allocation10 + $0x14] sm:$0xf]
    %v323 = vld [vmem:[#allocation10 + $0x18] sm:$0xf]
    %v324 = vld [vmem:[#allocation10 + $0x1c] sm:$0xf]
    %v325 = vld [vmem:[#allocation10 + $0x20] sm:$0xf]
    %v326 = vld [vmem:[#allocation10 + $0x24] sm:$0xf]
    %v327 = vld [vmem:[#allocation10 + $0x28] sm:$0xf]
    %v328 = vld [vmem:[#allocation10 + $0x2c] sm:$0xf]
    %v329 = vld [vmem:[#allocation10 + $0x30] sm:$0xf]
    %v330 = vld [vmem:[#allocation10 + $0x34] sm:$0xf]
    %v331 = vld [vmem:[#allocation10 + $0x38] sm:$0xf]
    %v332 = vld [vmem:[#allocation10 + $0x3c] sm:$0xf]
    %v333 = vld [vmem:[%s8] sm:$0x1]
    %v335 = vperm.slane %v333, 0
    %v353 = vunpack.c.l.b16 %v317
    %v354 = vunpack.c.l.b16 %v318
    %v355 = vunpack.c.l.b16 %v319
    %v356 = vunpack.c.l.b16 %v320
    %v357 = vunpack.c.l.b16 %v321
    %v358 = vunpack.c.l.b16 %v322
    %v359 = vunpack.c.l.b16 %v323
    %v360 = vunpack.c.l.b16 %v324
    %v361 = vunpack.c.l.b16 %v325
    %v362 = vunpack.c.l.b16 %v326
    %v363 = vunpack.c.l.b16 %v327
    %v364 = vunpack.c.l.b16 %v328
    %v365 = vunpack.c.l.b16 %v329
    %v366 = vunpack.c.l.b16 %v330
    %v367 = vunpack.c.l.b16 %v331
    %v368 = vunpack.c.l.b16 %v332
    %v369 = vpack.c.b16 %v354, %v353
    %v370 = vpack.c.b16 %v356, %v355
    %v371 = vpack.c.b16 %v358, %v357
    %v372 = vpack.c.b16 %v360, %v359
    %v373 = vpack.c.b16 %v362, %v361
    %v374 = vpack.c.b16 %v364, %v363
    %v375 = vpack.c.b16 %v366, %v365
    %v376 = vpack.c.b16 %v368, %v367
    %385 = vmatpush.bf16.msra.mxu0 %v376
    %386 = vmatpush.bf16.msra.mxu0 %v375
    %387 = vmatpush.bf16.msra.mxu0 %v374
    %388 = vmatpush.bf16.msra.mxu0 %v373
    %389 = vmatpush.bf16.msra.mxu0 %v372
    %390 = vmatpush.bf16.msra.mxu0 %v371
    %391 = vmatpush.bf16.msra.mxu0 %v370
    %392 = vmatpush.bf16.msra.mxu0 %v369
    %393 = vmatmul.bf16.gmra.mxu0 %v316
    %v394 = vpop.f32.mrf.mxu0
    %v395 = vadd.f32 %v335, %v394
    %v396 = vpop.f32.mrf.mxu0
    %397 = vdwg.mxu0
    %398 = vst [vmem:[#allocation11] sm:$0xff] %v395
    // Predicated region
    $region58: #{tpu_custom_call.1} parent=1 // pred_check
      _
    $region59: #{tpu_custom_call.1} parent=1 // pred_check_branch
      %400 = sbr.rel (0) target = $region61
    $region60: #{tpu_custom_call.1} parent=1 // pred_region
      %402 = vsyncadd [#allocation4], 0
      %s404 = sshll.u32 [#allocation11], 4
      %s405 = int_to_ptr.vmem [resolvable:$true] %s404
      %s406 = sshll.u32 %s9, 4
      %s407 = int_to_ptr.hbm [resolvable:$true] %s406
      %409 = dma.vmem_to_hbm [thread:$0]  %s405, 128, %s407, [#allocation4]
    $region61: #{tpu_custom_call.1} parent=1 // pred_fallthru
      _
    // Predicated region
    $region62: #{tpu_custom_call.1} parent=1 // pred_check
      _
    $region63: #{tpu_custom_call.1} parent=1 // pred_check_branch
      %411 = sbr.rel (0) target = $region65
    $region64: #{tpu_custom_call.1} parent=1 // pred_region
      %413 = dma.done [#allocation4], 128
    $region65: #{tpu_custom_call.1} parent=1 // pred_fallthru
      _
    %414 = vsyncpa [#allocation3], 1
    %415 = vsyncpa [#allocation6], 1
    %416 = vsyncpa [#allocation9], 1
    %417 = vsyncpa [#allocation4], 1

</llo_original>
